<compile_context>
chip_gen: v7x
topology: tpu7x:2x2x1
jax: 0.10.0
libtpu: 0.0.40
codegen_flags: <defaults>
</compile_context>

<pallas_src>
import functools

import jax
import jax.numpy as jnp
from jax.experimental import pallas as pl
from jax.experimental.pallas import tpu as pltpu

EPS = 1e-5
L_IN = 8            # fc1 = Linear(64*3, 64) forces L=8: conv1(k=3)->6, pool->3
C1, C2 = 32, 64
T1 = L_IN - 2       # 6 timesteps after conv1
T2 = T1 // 2        # 3 timesteps after pool / conv2
N_OUT = 9
OUT_PAD = 128       # lane-dense output slab width
LANES1 = T1 * C1    # 192, lane = t*32 + c
LANES2 = T2 * C2    # 192, lane = u*64 + d  (== permuted flatten order)
K2 = LANES1 - C1    # 160, lane width of the pooled tile fed to the fused conv2


def _round_up(n, m):
    return (n + m - 1) // m * m


def _cdiv(a, b):
    return (a + b - 1) // b


def _band_total(s, n_bands, band):
    """Sum a (1, n_bands*band) row over its `band`-lane groups, tile back.

    Replaces the old (192,192) f32 aggregation matmul with a few single-row
    slice/add/concat ops (VPU/XLU work on one vreg row — essentially free).
    """
    tot = s[:, 0:band]
    for g in range(1, n_bands):
        tot = tot + s[:, g * band:(g + 1) * band]
    return jnp.concatenate([tot] * n_bands, axis=1)


def _bn_banded(h, inv_n, gamma_b, beta_b, n_bands, band):
    """Training-mode BatchNorm1d on a channel-banded activation.

    h       : (rows, n_bands*band) f32, lane = g*band + c.
    inv_n   : scalar 1 / (n_valid_rows * n_bands).
    gamma_b, beta_b : (1, n_bands*band) affine params pre-tiled over the bands.
    Uses sum / sum-of-squares stats (f32) so zero rows contribute nothing, and
    a single fused-multiply-add for the affine.
    """
    s1 = jnp.sum(h, axis=0, keepdims=True)             # (1, G*C)
    s2 = jnp.sum(h * h, axis=0, keepdims=True)         # (1, G*C)
    s1 = _band_total(s1, n_bands, band)                # per-channel totals
    s2 = _band_total(s2, n_bands, band)
    mean = s1 * inv_n
    var = jnp.maximum(s2 * inv_n - mean * mean, 0.0)   # guard tiny negatives
    scale = gamma_b * jax.lax.rsqrt(var + EPS)
    shift = beta_b - mean * scale
    return h * scale + shift                           # one FMA pass


def conv1d_model_kernel(x_ref, wb_ref, w2_ref, fw1_ref, fw2_ref, slab_ref,
                        o_ref, *, b_total):
    tb = x_ref.shape[0]
    mm_dt = wb_ref.dtype

    # Only the last grid block can hold zero-padded rows.  Their pre-BN conv
    # outputs are exactly zero (conv biases dropped), so plain-sum BN stats are
    # already correct; the single mask multiply on the pooled tile keeps them
    # zero past BN1's affine shift so they cannot contaminate the BN2 stats.
    row0 = pl.program_id(0) * tb
    row_ids = jax.lax.broadcasted_iota(jnp.int32, (tb, 1), 0) + row0
    mask = (row_ids < b_total).astype(jnp.float32)                     # (tb, 1)
    n_valid = jnp.maximum(jnp.minimum(tb, b_total - row0), 1).astype(jnp.float32)

    # conv1 as one banded matmul: (tb, 8) @ (8, 192), lane = t*32 + c.
    # conv1 bias omitted: training-mode BN subtracts the per-channel mean, so a
    # pre-BN per-channel constant cancels exactly (variance unchanged).
    h1 = jnp.dot(x_ref[...], wb_ref[...], preferred_element_type=jnp.float32)

    # BatchNorm1d(32) over (valid rows x 6 timesteps) + ReLU.
    h1 = _bn_banded(h1, 1.0 / (n_valid * T1),
                    slab_ref[0:1, :], slab_ref[1:2, :], T1, C1)
    h1 = jnp.maximum(h1, 0.0)

    # Fused MaxPool1d(2) + conv2(1x1): adjacent timesteps live in adjacent
    # 32-lane bands, so a lane-shifted max drops the pooled values into bands
    # 0/64/128 of a (tb,160) tile (other bands are garbage) and ONE K=160
    # matmul against a spread weight that is zero in the garbage bands replaces
    # the previous three K=32 matmuls.  The shifted slice rides the XLU slot.
    p = jnp.maximum(h1[:, :K2], h1[:, C1:]) * mask                     # (tb,160)
    h2 = jnp.dot(p.astype(mm_dt), w2_ref[...],
                 preferred_element_type=jnp.float32)                   # (tb,192)
    # conv2 bias omitted (cancelled exactly by training-mode BN2, see above).

    # BatchNorm1d(64) over (valid rows x 3 timesteps) + ReLU.
    h2 = _bn_banded(h2, 1.0 / (n_valid * T2),
                    slab_ref[2:3, :], slab_ref[3:4, :], T2, C2)
    h2 = jnp.maximum(h2, 0.0)

    # Flatten is free: lane order u*64+d already matches the pre-permuted fc1
    # weight, so fc1/fc2 are plain lane-dense matmuls with f32 accumulation.
    z = jnp.dot(h2.astype(mm_dt), fw1_ref[...], preferred_element_type=jnp.float32)
    z = jnp.maximum(z + slab_ref[4:5, 0:C2], 0.0)                      # (tb, 64)

    y = jnp.dot(z.astype(mm_dt), fw2_ref[...], preferred_element_type=jnp.float32)
    o_ref[...] = jnp.maximum(y + slab_ref[5:6, 0:OUT_PAD], 0.0)        # (tb,128)


def pack_conv1d_params(params, *, use_bf16=True):
    """One-time host-side packing of the PyTorch weights into kernel layout.

    Hoisted out of the forward path (perf-review item): call once, reuse the
    result via conv1d_model_forward(x, packed=...).
    """
    f32 = jnp.float32
    mm_dt = jnp.bfloat16 if use_bf16 else f32

    # conv1 as a banded matmul: wb[l, t*32 + c] = conv1_w[c, 0, l - t].
    w1 = params["conv1_w"].reshape(C1, 3).astype(f32)
    wb = jnp.concatenate(
        [jnp.zeros((L_IN, C1), f32).at[t:t + 3, :].set(w1.T) for t in range(T1)],
        axis=1)                                                        # (8, 192)

    # conv2 (1x1) spread weight for the fused pool+conv2 matmul: pooled band u
    # sits at rows [2u*32, 2u*32+32) of the (tb,160) tile and writes output
    # band [u*64, (u+1)*64); garbage bands get zero rows.
    w2 = params["conv2_w"].reshape(C2, C1).astype(f32)
    w2blk = jnp.zeros((K2, LANES2), f32)
    for u in range(T2):
        w2blk = w2blk.at[2 * u * C1:(2 * u + 1) * C1,
                         u * C2:(u + 1) * C2].set(w2.T)                # (160, 192)

    # fc1: permute PyTorch flatten order (d*3+u) to lane order (u*64+d).
    fw1t = (params["fc1_w"].astype(f32)
            .reshape(C2, C2, T2).transpose(2, 1, 0).reshape(LANES2, C2))  # (192,64)

    # fc2 zero-padded to a 128-lane output slab (unmasked lane-dense stores).
    fw2t = jnp.zeros((C2, OUT_PAD), f32).at[:, :N_OUT].set(
        params["fc2_w"].astype(f32).T)                                 # (64, 128)

    # All tiny per-channel vectors in one resident f32 slab (stats math is f32).
    slab = jnp.zeros((8, LANES1), f32)
    slab = slab.at[0, :].set(jnp.tile(params["bn1_g"].astype(f32), T1))
    slab = slab.at[1, :].set(jnp.tile(params["bn1_b"].astype(f32), T1))
    slab = slab.at[2, :].set(jnp.tile(params["bn2_g"].astype(f32), T2))
    slab = slab.at[3, :].set(jnp.tile(params["bn2_b"].astype(f32), T2))
    slab = slab.at[4, :C2].set(params["fc1_b"].astype(f32))
    slab = slab.at[5, :N_OUT].set(params["fc2_b"].astype(f32))
    # conv1_b / conv2_b intentionally dropped: training-mode BN cancels a
    # per-channel pre-BN constant exactly.  They must come back if eval-mode
    # BN (running stats) is ever added.

    return {"wb": wb.astype(mm_dt), "w2blk": w2blk.astype(mm_dt),
            "fw1t": fw1t.astype(mm_dt), "fw2t": fw2t.astype(mm_dt),
            "slab": slab}


def conv1d_model_forward(x, params=None, *, packed=None, block_rows=4096,
                         min_blocks=1, use_bf16=True):
    """x: (B, 1, 8) (PyTorch NCL). Returns (B, 9) float32.

    block_rows: batch tile (multiple of 8).  4096 suits v5e/v6e/v7x; per-block
    BN stats only differ from PyTorch when B > block_rows.
    min_blocks: set to 2 on v7x to force an even grid split so both TensorCores
    get work (changes the per-block BN split for B <= block_rows).
    """
    f32 = jnp.float32
    assert params is not None or packed is not None
    if packed is None:
        packed = pack_conv1d_params(params, use_bf16=use_bf16)
    mm_dt = packed["wb"].dtype

    B = x.shape[0]
    assert x.shape == (B, 1, L_IN)
    assert block_rows % 8 == 0

    # ---- batch tiling: pad B up to a multiple of the block size ----
    tb = min(block_rows, _round_up(B, 8))
    if min_blocks > 1:
        tb = max(8, min(tb, _round_up(_cdiv(B, min_blocks), 8)))
    bp = _round_up(B, tb)
    nb = bp // tb

    x2d = x.reshape(B, L_IN).astype(f32)
    if bp != B:
        x2d = jnp.pad(x2d, ((0, bp - B), (0, 0)))

    kernel = functools.partial(conv1d_model_kernel, b_total=B)
    const = lambda j: (0, 0)        # weights: constant index_map -> stay resident
    out = pl.pallas_call(
        kernel,
        out_shape=jax.ShapeDtypeStruct((bp, OUT_PAD), f32),
        grid=(nb,),
        in_specs=[
            pl.BlockSpec((tb, L_IN), lambda j: (j, 0)),        # x (pipelined)
            pl.BlockSpec((L_IN, LANES1), const),               # banded conv1 w
            pl.BlockSpec((K2, LANES2), const),                 # fused pool+conv2 w
            pl.BlockSpec((LANES2, C2), const),                 # fc1 w (permuted)
            pl.BlockSpec((C2, OUT_PAD), const),                # fc2 w (padded)
            pl.BlockSpec((8, LANES1), const),                  # packed vectors
        ],
        out_specs=pl.BlockSpec((tb, OUT_PAD), lambda j: (j, 0)),
        compiler_params=pltpu.CompilerParams(
            # independent blocks (per-block BN stats) -> megacore split on v7x
            dimension_semantics=("parallel",),
            vmem_limit_bytes=64 * 1024 * 1024,
        ),
    )(x2d.astype(mm_dt), packed["wb"], packed["w2blk"],
      packed["fw1t"], packed["fw2t"], packed["slab"])
    return out[:B, :N_OUT]


def _reference_forward(x, params):
    """Pure-JAX reference of Conv1DModel.forward (training-mode BN)."""
    f32 = jnp.float32
    B = x.shape[0]
    x2d = x.reshape(B, L_IN).astype(f32)
    w1 = params["conv1_w"].reshape(C1, 3).astype(f32)
    h = jnp.stack([x2d[:, t:t + 3] @ w1.T for t in range(T1)], axis=2)  # (B,32,6)
    h = h + params["conv1_b"][None, :, None]

    def bn(a, g, b):                                    # a: (B, C, T)
        m = a.mean(axis=(0, 2), keepdims=True)
        v = ((a - m) ** 2).mean(axis=(0, 2), keepdims=True)
        return (a - m) * jax.lax.rsqrt(v + EPS) * g[None, :, None] + b[None, :, None]

    h = jax.nn.relu(bn(h, params["bn1_g"], params["bn1_b"]))
    h = jnp.maximum(h[:, :, 0::2], h[:, :, 1::2])                       # (B,32,3)
    w2 = params["conv2_w"].reshape(C2, C1).astype(f32)
    h = jnp.einsum("bct,dc->bdt", h, w2) + params["conv2_b"][None, :, None]
    h = jax.nn.relu(bn(h, params["bn2_g"], params["bn2_b"]))
    hf = h.reshape(B, -1)                                               # (B,192)
    z = jax.nn.relu(hf @ params["fc1_w"].T + params["fc1_b"])
    return jax.nn.relu(z @ params["fc2_w"].T + params["fc2_b"])


if __name__ == "__main__":
    key = jax.random.PRNGKey(0)
    ks = jax.random.split(key, 8)
    B = 2
    x = jax.random.normal(ks[0], (B, 1, L_IN), jnp.float32)

    params = {
        "conv1_w": jax.random.normal(ks[1], (C1, 1, 3), jnp.float32) * 0.1,
        "conv1_b": jax.random.normal(ks[2], (C1,), jnp.float32) * 0.1,
        "bn1_g": jnp.ones((C1,), jnp.float32),
        "bn1_b": jnp.zeros((C1,), jnp.float32),
        "conv2_w": jax.random.normal(ks[3], (C2, C1, 1), jnp.float32) * 0.1,
        "conv2_b": jax.random.normal(ks[4], (C2,), jnp.float32) * 0.1,
        "bn2_g": jnp.ones((C2,), jnp.float32),
        "bn2_b": jnp.zeros((C2,), jnp.float32),
        "fc1_w": jax.random.normal(ks[5], (C2, C2 * T2), jnp.float32) * 0.05,
        "fc1_b": jax.random.normal(ks[6], (C2,), jnp.float32) * 0.05,
        "fc2_w": jax.random.normal(ks[7], (N_OUT, C2), jnp.float32) * 0.05,
        "fc2_b": jnp.zeros((N_OUT,), jnp.float32),
    }

    ref = _reference_forward(x, params)

    # Default path: pack weights once (bf16 carry), reuse across calls.
    packed = pack_conv1d_params(params, use_bf16=True)
    out = conv1d_model_forward(x, packed=packed)
    jax.block_until_ready(out)
    assert out.shape == (B, N_OUT) and out.dtype == jnp.float32
    # bf16 path tolerance check (review item): inputs/weights are quantized
    # before the MXU, stats/accumulation stay f32.
    assert jnp.allclose(out, ref, rtol=1e-1, atol=1e-1)

    # Exact-f32 path, tight tolerance against the pure-JAX reference.
    out_f32 = conv1d_model_forward(x, params, use_bf16=False)
    jax.block_until_ready(out_f32)
    assert jnp.allclose(out_f32, ref, rtol=1e-3, atol=1e-3)

    print("KERNEL_OK")
</pallas_src>

<mosaic_0001>
module attributes {stable_mosaic.version = 11 : i64} {
  func.func @conv1d_model_kernel(%arg0: i32, %arg1: memref<8x8xbf16, #tpu.memory_space<vmem>>, %arg2: memref<8x192xbf16, #tpu.memory_space<vmem>>, %arg3: memref<160x192xbf16, #tpu.memory_space<vmem>>, %arg4: memref<192x64xbf16, #tpu.memory_space<vmem>>, %arg5: memref<64x128xbf16, #tpu.memory_space<vmem>>, %arg6: memref<8x192xf32, #tpu.memory_space<vmem>>, %arg7: memref<8x128xf32, #tpu.memory_space<vmem>>) attributes {dimension_semantics = [#tpu.dimension_semantics<parallel>], iteration_bounds = array<i64: 1>, scalar_prefetch = 0 : i64, scratch_operands = 0 : i64, tpu.core_type = #tpu.core_type<tc>, window_params = [{transform_indices = @transform_0, window_bounds = array<i64: 8, 8>}, {pipeline_mode = #tpu.pipeline_mode<synchronous>, transform_indices = @transform_1, window_bounds = array<i64: 8, 192>}, {pipeline_mode = #tpu.pipeline_mode<synchronous>, transform_indices = @transform_2, window_bounds = array<i64: 160, 192>}, {pipeline_mode = #tpu.pipeline_mode<synchronous>, transform_indices = @transform_3, window_bounds = array<i64: 192, 64>}, {pipeline_mode = #tpu.pipeline_mode<synchronous>, transform_indices = @transform_4, window_bounds = array<i64: 64, 128>}, {pipeline_mode = #tpu.pipeline_mode<synchronous>, transform_indices = @transform_5, window_bounds = array<i64: 8, 192>}, {transform_indices = @transform_6, window_bounds = array<i64: 8, 128>}]} {
    %c8_i32 = arith.constant 8 : i32
    %0 = arith.muli %arg0, %c8_i32 : i32
    %1 = tpu.iota {dimensions = array<i32: 0>} : vector<8x1xi32>
    %2 = vector.broadcast %0 : i32 to vector<8x1xi32>
    %3 = arith.addi %1, %2 : vector<8x1xi32>
    %c2_i32 = arith.constant 2 : i32
    %4 = vector.broadcast %c2_i32 : i32 to vector<8x1xi32>
    %5 = arith.cmpi slt, %3, %4 : vector<8x1xi32>
    %6 = arith.extui %5 : vector<8x1xi1> to vector<8x1xi32>
    %7 = arith.sitofp %6 : vector<8x1xi32> to vector<8x1xf32>
    %c2_i32_0 = arith.constant 2 : i32
    %8 = arith.subi %c2_i32_0, %0 : i32
    %c8_i32_1 = arith.constant 8 : i32
    %9 = arith.minsi %c8_i32_1, %8 : i32
    %c1_i32 = arith.constant 1 : i32
    %10 = arith.maxsi %9, %c1_i32 : i32
    %11 = arith.sitofp %10 : i32 to f32
    %c0 = arith.constant 0 : index
    %c0_2 = arith.constant 0 : index
    %12 = vector.load %arg1[%c0, %c0_2] : memref<8x8xbf16, #tpu.memory_space<vmem>>, vector<8x8xbf16>
    %c0_3 = arith.constant 0 : index
    %c0_4 = arith.constant 0 : index
    %13 = vector.load %arg2[%c0_3, %c0_4] : memref<8x192xbf16, #tpu.memory_space<vmem>>, vector<8x192xbf16>
    %cst = arith.constant dense<0.000000e+00> : vector<8x192xf32>
    %14 = tpu.matmul %12, %13, %cst {dimension_numbers = #tpu.dot_dimension_numbers<[1], [0], [0], [1], [0, 0, 1, 1], [], []>} : vector<8x8xbf16>, vector<8x192xbf16>, vector<8x192xf32> -> vector<8x192xf32>
    %cst_5 = arith.constant 6.000000e+00 : f32
    %15 = arith.mulf %11, %cst_5 : f32
    %cst_6 = arith.constant 1.000000e+00 : f32
    %16 = arith.divf %cst_6, %15 : f32
    %c0_7 = arith.constant 0 : index
    %c0_8 = arith.constant 0 : index
    %17 = vector.load %arg6[%c0_7, %c0_8] : memref<8x192xf32, #tpu.memory_space<vmem>>, vector<1x192xf32>
    %c1 = arith.constant 1 : index
    %c0_9 = arith.constant 0 : index
    %18 = vector.load %arg6[%c1, %c0_9] : memref<8x192xf32, #tpu.memory_space<vmem>>, vector<1x192xf32>
    %cst_10 = arith.constant dense<0.000000e+00> : vector<192xf32>
    %19 = vector.multi_reduction <add>, %14, %cst_10 [0] : vector<8x192xf32> to vector<192xf32>
    %20 = vector.shape_cast %19 : vector<192xf32> to vector<1x192xf32>
    %21 = arith.mulf %14, %14 : vector<8x192xf32>
    %cst_11 = arith.constant dense<0.000000e+00> : vector<192xf32>
    %22 = vector.multi_reduction <add>, %21, %cst_11 [0] : vector<8x192xf32> to vector<192xf32>
    %23 = vector.shape_cast %22 : vector<192xf32> to vector<1x192xf32>
    %24 = vector.extract_strided_slice %20 {offsets = [0, 0], sizes = [1, 32], strides = [1, 1]} : vector<1x192xf32> to vector<1x32xf32>
    %25 = vector.extract_strided_slice %20 {offsets = [0, 32], sizes = [1, 32], strides = [1, 1]} : vector<1x192xf32> to vector<1x32xf32>
    %26 = arith.addf %24, %25 : vector<1x32xf32>
    %27 = vector.extract_strided_slice %20 {offsets = [0, 64], sizes = [1, 32], strides = [1, 1]} : vector<1x192xf32> to vector<1x32xf32>
    %28 = arith.addf %26, %27 : vector<1x32xf32>
    %29 = vector.extract_strided_slice %20 {offsets = [0, 96], sizes = [1, 32], strides = [1, 1]} : vector<1x192xf32> to vector<1x32xf32>
    %30 = arith.addf %28, %29 : vector<1x32xf32>
    %31 = vector.extract_strided_slice %20 {offsets = [0, 128], sizes = [1, 32], strides = [1, 1]} : vector<1x192xf32> to vector<1x32xf32>
    %32 = arith.addf %30, %31 : vector<1x32xf32>
    %33 = vector.extract_strided_slice %20 {offsets = [0, 160], sizes = [1, 32], strides = [1, 1]} : vector<1x192xf32> to vector<1x32xf32>
    %34 = arith.addf %32, %33 : vector<1x32xf32>
    %35 = tpu.concatenate %34, %34, %34, %34, %34, %34 in 1 : vector<1x32xf32>, vector<1x32xf32>, vector<1x32xf32>, vector<1x32xf32>, vector<1x32xf32>, vector<1x32xf32> -> vector<1x192xf32>
    %36 = vector.extract_strided_slice %23 {offsets = [0, 0], sizes = [1, 32], strides = [1, 1]} : vector<1x192xf32> to vector<1x32xf32>
    %37 = vector.extract_strided_slice %23 {offsets = [0, 32], sizes = [1, 32], strides = [1, 1]} : vector<1x192xf32> to vector<1x32xf32>
    %38 = arith.addf %36, %37 : vector<1x32xf32>
    %39 = vector.extract_strided_slice %23 {offsets = [0, 64], sizes = [1, 32], strides = [1, 1]} : vector<1x192xf32> to vector<1x32xf32>
    %40 = arith.addf %38, %39 : vector<1x32xf32>
    %41 = vector.extract_strided_slice %23 {offsets = [0, 96], sizes = [1, 32], strides = [1, 1]} : vector<1x192xf32> to vector<1x32xf32>
    %42 = arith.addf %40, %41 : vector<1x32xf32>
    %43 = vector.extract_strided_slice %23 {offsets = [0, 128], sizes = [1, 32], strides = [1, 1]} : vector<1x192xf32> to vector<1x32xf32>
    %44 = arith.addf %42, %43 : vector<1x32xf32>
    %45 = vector.extract_strided_slice %23 {offsets = [0, 160], sizes = [1, 32], strides = [1, 1]} : vector<1x192xf32> to vector<1x32xf32>
    %46 = arith.addf %44, %45 : vector<1x32xf32>
    %47 = tpu.concatenate %46, %46, %46, %46, %46, %46 in 1 : vector<1x32xf32>, vector<1x32xf32>, vector<1x32xf32>, vector<1x32xf32>, vector<1x32xf32>, vector<1x32xf32> -> vector<1x192xf32>
    %48 = vector.broadcast %16 : f32 to vector<1x192xf32>
    %49 = arith.mulf %35, %48 : vector<1x192xf32>
    %50 = vector.broadcast %16 : f32 to vector<1x192xf32>
    %51 = arith.mulf %47, %50 : vector<1x192xf32>
    %52 = arith.mulf %49, %49 : vector<1x192xf32>
    %53 = arith.subf %51, %52 : vector<1x192xf32>
    %cst_12 = arith.constant 0.000000e+00 : f32
    %54 = vector.broadcast %cst_12 : f32 to vector<1x192xf32>
    %55 = arith.maximumf %53, %54 : vector<1x192xf32>
    %cst_13 = arith.constant 9.99999974E-6 : f32
    %56 = vector.broadcast %cst_13 : f32 to vector<1x192xf32>
    %57 = arith.addf %55, %56 : vector<1x192xf32>
    %58 = math.rsqrt %57 : vector<1x192xf32>
    %59 = arith.mulf %17, %58 : vector<1x192xf32>
    %60 = arith.mulf %49, %59 : vector<1x192xf32>
    %61 = arith.subf %18, %60 : vector<1x192xf32>
    %62 = vector.broadcast %59 : vector<1x192xf32> to vector<8x192xf32>
    %63 = arith.mulf %14, %62 : vector<8x192xf32>
    %64 = vector.broadcast %61 : vector<1x192xf32> to vector<8x192xf32>
    %65 = arith.addf %63, %64 : vector<8x192xf32>
    %cst_14 = arith.constant 0.000000e+00 : f32
    %66 = vector.broadcast %cst_14 : f32 to vector<8x192xf32>
    %67 = arith.maximumf %65, %66 : vector<8x192xf32>
    %68 = vector.extract_strided_slice %67 {offsets = [0, 0], sizes = [8, 160], strides = [1, 1]} : vector<8x192xf32> to vector<8x160xf32>
    %69 = vector.extract_strided_slice %67 {offsets = [0, 32], sizes = [8, 160], strides = [1, 1]} : vector<8x192xf32> to vector<8x160xf32>
    %70 = arith.maximumf %68, %69 : vector<8x160xf32>
    %71 = vector.broadcast %7 : vector<8x1xf32> to vector<8x160xf32>
    %72 = arith.mulf %70, %71 : vector<8x160xf32>
    %73 = arith.truncf %72 : vector<8x160xf32> to vector<8x160xbf16>
    %c0_15 = arith.constant 0 : index
    %c0_16 = arith.constant 0 : index
    %74 = vector.load %arg3[%c0_15, %c0_16] : memref<160x192xbf16, #tpu.memory_space<vmem>>, vector<160x192xbf16>
    %cst_17 = arith.constant dense<0.000000e+00> : vector<8x192xf32>
    %75 = tpu.matmul %73, %74, %cst_17 {dimension_numbers = #tpu.dot_dimension_numbers<[1], [0], [0], [1], [0, 0, 1, 1], [], []>} : vector<8x160xbf16>, vector<160x192xbf16>, vector<8x192xf32> -> vector<8x192xf32>
    %cst_18 = arith.constant 3.000000e+00 : f32
    %76 = arith.mulf %11, %cst_18 : f32
    %cst_19 = arith.constant 1.000000e+00 : f32
    %77 = arith.divf %cst_19, %76 : f32
    %c2 = arith.constant 2 : index
    %c0_20 = arith.constant 0 : index
    %78 = vector.load %arg6[%c2, %c0_20] : memref<8x192xf32, #tpu.memory_space<vmem>>, vector<1x192xf32>
    %c3 = arith.constant 3 : index
    %c0_21 = arith.constant 0 : index
    %79 = vector.load %arg6[%c3, %c0_21] : memref<8x192xf32, #tpu.memory_space<vmem>>, vector<1x192xf32>
    %cst_22 = arith.constant dense<0.000000e+00> : vector<192xf32>
    %80 = vector.multi_reduction <add>, %75, %cst_22 [0] : vector<8x192xf32> to vector<192xf32>
    %81 = vector.shape_cast %80 : vector<192xf32> to vector<1x192xf32>
    %82 = arith.mulf %75, %75 : vector<8x192xf32>
    %cst_23 = arith.constant dense<0.000000e+00> : vector<192xf32>
    %83 = vector.multi_reduction <add>, %82, %cst_23 [0] : vector<8x192xf32> to vector<192xf32>
    %84 = vector.shape_cast %83 : vector<192xf32> to vector<1x192xf32>
    %85 = vector.extract_strided_slice %81 {offsets = [0, 0], sizes = [1, 64], strides = [1, 1]} : vector<1x192xf32> to vector<1x64xf32>
    %86 = vector.extract_strided_slice %81 {offsets = [0, 64], sizes = [1, 64], strides = [1, 1]} : vector<1x192xf32> to vector<1x64xf32>
    %87 = arith.addf %85, %86 : vector<1x64xf32>
    %88 = vector.extract_strided_slice %81 {offsets = [0, 128], sizes = [1, 64], strides = [1, 1]} : vector<1x192xf32> to vector<1x64xf32>
    %89 = arith.addf %87, %88 : vector<1x64xf32>
    %90 = tpu.concatenate %89, %89, %89 in 1 : vector<1x64xf32>, vector<1x64xf32>, vector<1x64xf32> -> vector<1x192xf32>
    %91 = vector.extract_strided_slice %84 {offsets = [0, 0], sizes = [1, 64], strides = [1, 1]} : vector<1x192xf32> to vector<1x64xf32>
    %92 = vector.extract_strided_slice %84 {offsets = [0, 64], sizes = [1, 64], strides = [1, 1]} : vector<1x192xf32> to vector<1x64xf32>
    %93 = arith.addf %91, %92 : vector<1x64xf32>
    %94 = vector.extract_strided_slice %84 {offsets = [0, 128], sizes = [1, 64], strides = [1, 1]} : vector<1x192xf32> to vector<1x64xf32>
    %95 = arith.addf %93, %94 : vector<1x64xf32>
    %96 = tpu.concatenate %95, %95, %95 in 1 : vector<1x64xf32>, vector<1x64xf32>, vector<1x64xf32> -> vector<1x192xf32>
    %97 = vector.broadcast %77 : f32 to vector<1x192xf32>
    %98 = arith.mulf %90, %97 : vector<1x192xf32>
    %99 = vector.broadcast %77 : f32 to vector<1x192xf32>
    %100 = arith.mulf %96, %99 : vector<1x192xf32>
    %101 = arith.mulf %98, %98 : vector<1x192xf32>
    %102 = arith.subf %100, %101 : vector<1x192xf32>
    %cst_24 = arith.constant 0.000000e+00 : f32
    %103 = vector.broadcast %cst_24 : f32 to vector<1x192xf32>
    %104 = arith.maximumf %102, %103 : vector<1x192xf32>
    %cst_25 = arith.constant 9.99999974E-6 : f32
    %105 = vector.broadcast %cst_25 : f32 to vector<1x192xf32>
    %106 = arith.addf %104, %105 : vector<1x192xf32>
    %107 = math.rsqrt %106 : vector<1x192xf32>
    %108 = arith.mulf %78, %107 : vector<1x192xf32>
    %109 = arith.mulf %98, %108 : vector<1x192xf32>
    %110 = arith.subf %79, %109 : vector<1x192xf32>
    %111 = vector.broadcast %108 : vector<1x192xf32> to vector<8x192xf32>
    %112 = arith.mulf %75, %111 : vector<8x192xf32>
    %113 = vector.broadcast %110 : vector<1x192xf32> to vector<8x192xf32>
    %114 = arith.addf %112, %113 : vector<8x192xf32>
    %cst_26 = arith.constant 0.000000e+00 : f32
    %115 = vector.broadcast %cst_26 : f32 to vector<8x192xf32>
    %116 = arith.maximumf %114, %115 : vector<8x192xf32>
    %117 = arith.truncf %116 : vector<8x192xf32> to vector<8x192xbf16>
    %c0_27 = arith.constant 0 : index
    %c0_28 = arith.constant 0 : index
    %118 = vector.load %arg4[%c0_27, %c0_28] : memref<192x64xbf16, #tpu.memory_space<vmem>>, vector<192x64xbf16>
    %cst_29 = arith.constant dense<0.000000e+00> : vector<8x64xf32>
    %119 = tpu.matmul %117, %118, %cst_29 {dimension_numbers = #tpu.dot_dimension_numbers<[1], [0], [0], [1], [0, 0, 1, 1], [], []>} : vector<8x192xbf16>, vector<192x64xbf16>, vector<8x64xf32> -> vector<8x64xf32>
    %c4 = arith.constant 4 : index
    %c0_30 = arith.constant 0 : index
    %120 = vector.load %arg6[%c4, %c0_30] : memref<8x192xf32, #tpu.memory_space<vmem>>, vector<1x64xf32>
    %121 = vector.broadcast %120 : vector<1x64xf32> to vector<8x64xf32>
    %122 = arith.addf %119, %121 : vector<8x64xf32>
    %cst_31 = arith.constant 0.000000e+00 : f32
    %123 = vector.broadcast %cst_31 : f32 to vector<8x64xf32>
    %124 = arith.maximumf %122, %123 : vector<8x64xf32>
    %125 = arith.truncf %124 : vector<8x64xf32> to vector<8x64xbf16>
    %c0_32 = arith.constant 0 : index
    %c0_33 = arith.constant 0 : index
    %126 = vector.load %arg5[%c0_32, %c0_33] : memref<64x128xbf16, #tpu.memory_space<vmem>>, vector<64x128xbf16>
    %cst_34 = arith.constant dense<0.000000e+00> : vector<8x128xf32>
    %127 = tpu.matmul %125, %126, %cst_34 {dimension_numbers = #tpu.dot_dimension_numbers<[1], [0], [0], [1], [0, 0, 1, 1], [], []>} : vector<8x64xbf16>, vector<64x128xbf16>, vector<8x128xf32> -> vector<8x128xf32>
    %c5 = arith.constant 5 : index
    %c0_35 = arith.constant 0 : index
    %128 = vector.load %arg6[%c5, %c0_35] : memref<8x192xf32, #tpu.memory_space<vmem>>, vector<1x128xf32>
    %129 = vector.broadcast %128 : vector<1x128xf32> to vector<8x128xf32>
    %130 = arith.addf %127, %129 : vector<8x128xf32>
    %cst_36 = arith.constant 0.000000e+00 : f32
    %131 = vector.broadcast %cst_36 : f32 to vector<8x128xf32>
    %132 = arith.maximumf %130, %131 : vector<8x128xf32>
    %c0_37 = arith.constant 0 : index
    %c0_38 = arith.constant 0 : index
    %133 = vector.load %arg7[%c0_37, %c0_38] : memref<8x128xf32, #tpu.memory_space<vmem>>, vector<8x128xf32>
    tpu.vector_store %arg7[%c0_37, %c0_38], %132 {strides = array<i32>} : memref<8x128xf32, #tpu.memory_space<vmem>>, vector<8x128xf32>,
    return
  }
  func.func @transform_0(%arg0: i32) -> (i32, i32) {
    %c0_i32 = arith.constant 0 : i32
    %c0_i32_0 = arith.constant 0 : i32
    return %arg0, %c0_i32 : i32, i32
  }
  func.func @transform_1(%arg0: i32) -> (i32, i32) {
    %c0_i32 = arith.constant 0 : i32
    %c0_i32_0 = arith.constant 0 : i32
    %c0_i32_1 = arith.constant 0 : i32
    return %c0_i32, %c0_i32_0 : i32, i32
  }
  func.func @transform_2(%arg0: i32) -> (i32, i32) {
    %c0_i32 = arith.constant 0 : i32
    %c0_i32_0 = arith.constant 0 : i32
    %c0_i32_1 = arith.constant 0 : i32
    return %c0_i32, %c0_i32_0 : i32, i32
  }
  func.func @transform_3(%arg0: i32) -> (i32, i32) {
    %c0_i32 = arith.constant 0 : i32
    %c0_i32_0 = arith.constant 0 : i32
    %c0_i32_1 = arith.constant 0 : i32
    return %c0_i32, %c0_i32_0 : i32, i32
  }
  func.func @transform_4(%arg0: i32) -> (i32, i32) {
    %c0_i32 = arith.constant 0 : i32
    %c0_i32_0 = arith.constant 0 : i32
    %c0_i32_1 = arith.constant 0 : i32
    return %c0_i32, %c0_i32_0 : i32, i32
  }
  func.func @transform_5(%arg0: i32) -> (i32, i32) {
    %c0_i32 = arith.constant 0 : i32
    %c0_i32_0 = arith.constant 0 : i32
    %c0_i32_1 = arith.constant 0 : i32
    return %c0_i32, %c0_i32_0 : i32, i32
  }
  func.func @transform_6(%arg0: i32) -> (i32, i32) {
    %c0_i32 = arith.constant 0 : i32
    %c0_i32_0 = arith.constant 0 : i32
    return %arg0, %c0_i32 : i32, i32
  }
}

</mosaic_0001>

<llo_original>
// kernel: tpu_custom_call.1
$region0: #{tpu_custom_call.1}
  #allocation0 [shape = 'u32[]', space=smem, size = 0x4, offset = 0x4, fixed_abs, tag = 'smem constant byte address 0x4 - core index']
  #allocation1 [shape = 'u32[144,128]{1,0:T(1,128)}', space=vmem, size = 0x12000, scoped, tag = 'internal scratch']
  %s0 = inlined_call_operand.hbm [shape: bf16[8,8], index: 0, kind: input, shape index: {}]
  %s1 = inlined_call_operand.hbm [shape: bf16[8,192], index: 1, kind: input, shape index: {}]
  %s2 = inlined_call_operand.hbm [shape: bf16[160,192], index: 2, kind: input, shape index: {}]
  %s3 = inlined_call_operand.hbm [shape: bf16[192,64], index: 3, kind: input, shape index: {}]
  %s4 = inlined_call_operand.hbm [shape: bf16[64,128], index: 4, kind: input, shape index: {}]
  %s5 = inlined_call_operand.hbm [shape: f32[8,192], index: 5, kind: input, shape index: {}]
  %s6 = inlined_call_operand.hbm [shape: f32[8,128], index: 6, kind: output, shape index: {}]
  %s7 = sld [smem:[#allocation0]]
  $region58: #{tpu_custom_call.1} parent=0
    _
  %s9 = ssub.s32 1, %s7
  %s10 = scalar_select 0, %s9, %s7
  $region1: #{tpu_custom_call.1} parent=0
    #allocation2 [shape = 'u8[2048]{0}', space=vmem, size = 0x800, scoped, tag = 'input window, operand 0, single buffered']
    #allocation3 [shape = 's32[1]{0}', space=sflag, size = 0x4, scoped, tag = 'scoped memory for tpu_custom_call.1']
    #allocation4 [shape = 's32[1]{0}', space=sflag, size = 0x4, scoped, tag = 'scoped memory for tpu_custom_call.1']
    #allocation5 [shape = 'u8[4096]{0}', space=vmem, size = 0x1000, scoped, tag = 'input window, operand 1, single buffered']
    #allocation6 [shape = 's32[1]{0}', space=sflag, size = 0x4, scoped, tag = 'scoped memory for tpu_custom_call.1']
    #allocation7 [shape = 'u8[81920]{0}', space=vmem, size = 0x14000, scoped, tag = 'input window, operand 2, single buffered']
    #allocation8 [shape = 'u8[49152]{0}', space=vmem, size = 0xc000, scoped, tag = 'input window, operand 3, single buffered']
    #allocation9 [shape = 's32[1]{0}', space=sflag, size = 0x4, scoped, tag = 'scoped memory for tpu_custom_call.1']
    #allocation10 [shape = 'u8[16384]{0}', space=vmem, size = 0x4000, scoped, tag = 'input window, operand 4, single buffered']
    #allocation11 [shape = 'u8[8192]{0}', space=vmem, size = 0x2000, scoped, tag = 'input window, operand 5, single buffered']
    #allocation12 [shape = 's32[1]{0}', space=sflag, size = 0x4, scoped, tag = 'scoped memory for tpu_custom_call.1']
    #allocation13 [shape = 'u8[4096]{0}', space=vmem, size = 0x1000, scoped, tag = 'output window, operand 0, single buffered']
    %11 = vsyncpa [#allocation3], 0
    %12 = vsyncpa [#allocation6], 0
    %13 = vsyncpa [#allocation9], 0
    %14 = vsyncpa [#allocation12], 0
    %15 = vsyncpa [#allocation4], 0
    // Predicated region
    $region2: #{tpu_custom_call.1} parent=1 // pred_check
      _
    $region3: #{tpu_custom_call.1} parent=1 // pred_check_branch
      %17 = sbr.rel (0) target = $region5
    $region4: #{tpu_custom_call.1} parent=1 // pred_region
      %s19 = ssub.s32 64, 64
      %20 = vsyncadd [#allocation3], %s19
      %s22 = sshll.u32 [#allocation2], 4
      %s23 = int_to_ptr.vmem [resolvable:$true] %s22
      %25 = dma.hbm_to_vmem [thread:$0]  %s0, 64, %s23, [#allocation3]
    $region5: #{tpu_custom_call.1} parent=1 // pred_fallthru
      _
    // Predicated region
    $region6: #{tpu_custom_call.1} parent=1 // pred_check
      _
    $region7: #{tpu_custom_call.1} parent=1 // pred_check_branch
      %27 = sbr.rel (0) target = $region9
    $region8: #{tpu_custom_call.1} parent=1 // pred_region
      %s29 = ssub.s32 128, 128
      %30 = vsyncadd [#allocation6], %s29
      %s32 = sshll.u32 [#allocation5], 4
      %s33 = int_to_ptr.vmem [resolvable:$true] %s32
      %35 = dma.hbm_to_vmem [thread:$0]  %s1, 128, %s33, [#allocation6]
    $region9: #{tpu_custom_call.1} parent=1 // pred_fallthru
      _
    // Predicated region
    $region10: #{tpu_custom_call.1} parent=1 // pred_check
      _
    $region11: #{tpu_custom_call.1} parent=1 // pred_check_branch
      %37 = sbr.rel (0) target = $region13
    $region12: #{tpu_custom_call.1} parent=1 // pred_region
      %s39 = ssub.s32 2560, 2560
      %40 = vsyncadd [#allocation6], %s39
      %s41 = sshll.u32 [#allocation7], 4
      %s42 = int_to_ptr.vmem [resolvable:$true] %s41
      %47 = dma.hbm_to_vmem [thread:$0]  %s2, 2560, %s42, [#allocation6], 128, 128, 8
    $region13: #{tpu_custom_call.1} parent=1 // pred_fallthru
      _
    // Predicated region
    $region14: #{tpu_custom_call.1} parent=1 // pred_check
      _
    $region15: #{tpu_custom_call.1} parent=1 // pred_check_branch
      %49 = sbr.rel (0) target = $region17
    $region16: #{tpu_custom_call.1} parent=1 // pred_region
      %s51 = ssub.s32 1536, 1536
      %52 = vsyncadd [#allocation9], %s51
      %s53 = sshll.u32 [#allocation8], 4
      %s54 = int_to_ptr.vmem [resolvable:$true] %s53
      %59 = dma.hbm_to_vmem [thread:$0]  %s3, 1536, %s54, [#allocation9], 64, 64, 4
    $region17: #{tpu_custom_call.1} parent=1 // pred_fallthru
      _
    // Predicated region
    $region18: #{tpu_custom_call.1} parent=1 // pred_check
      _
    $region19: #{tpu_custom_call.1} parent=1 // pred_check_branch
      %61 = sbr.rel (0) target = $region21
    $region20: #{tpu_custom_call.1} parent=1 // pred_region
      %s63 = ssub.s32 512, 512
      %64 = vsyncadd [#allocation9], %s63
      %s65 = sshll.u32 [#allocation10], 4
      %s66 = int_to_ptr.vmem [resolvable:$true] %s65
      %71 = dma.hbm_to_vmem [thread:$0]  %s4, 512, %s66, [#allocation9], 64, 64, 4
    $region21: #{tpu_custom_call.1} parent=1 // pred_fallthru
      _
    // Predicated region
    $region22: #{tpu_custom_call.1} parent=1 // pred_check
      _
    $region23: #{tpu_custom_call.1} parent=1 // pred_check_branch
      %73 = sbr.rel (0) target = $region25
    $region24: #{tpu_custom_call.1} parent=1 // pred_region
      %s75 = ssub.s32 256, 256
      %76 = vsyncadd [#allocation12], %s75
      %s78 = sshll.u32 [#allocation11], 4
      %s79 = int_to_ptr.vmem [resolvable:$true] %s78
      %81 = dma.hbm_to_vmem [thread:$0]  %s5, 256, %s79, [#allocation12]
    $region25: #{tpu_custom_call.1} parent=1 // pred_fallthru
      _
    // Predicated region
    $region26: #{tpu_custom_call.1} parent=1 // pred_check
      _
    $region27: #{tpu_custom_call.1} parent=1 // pred_check_branch
      %83 = sbr.rel (0) target = $region29
    $region28: #{tpu_custom_call.1} parent=1 // pred_region
      %84 = dma.done [#allocation3], 64
    $region29: #{tpu_custom_call.1} parent=1 // pred_fallthru
      _
    // Predicated region
    $region30: #{tpu_custom_call.1} parent=1 // pred_check
      _
    $region31: #{tpu_custom_call.1} parent=1 // pred_check_branch
      %86 = sbr.rel (0) target = $region33
    $region32: #{tpu_custom_call.1} parent=1 // pred_region
      %87 = dma.done [#allocation6], 128
    $region33: #{tpu_custom_call.1} parent=1 // pred_fallthru
      _
    // Predicated region
    $region34: #{tpu_custom_call.1} parent=1 // pred_check
      _
    $region35: #{tpu_custom_call.1} parent=1 // pred_check_branch
      %89 = sbr.rel (0) target = $region37
    $region36: #{tpu_custom_call.1} parent=1 // pred_region
      %90 = dma.done [#allocation6], 2560
    $region37: #{tpu_custom_call.1} parent=1 // pred_fallthru
      _
    // Predicated region
    $region38: #{tpu_custom_call.1} parent=1 // pred_check
      _
    $region39: #{tpu_custom_call.1} parent=1 // pred_check_branch
      %92 = sbr.rel (0) target = $region41
    $region40: #{tpu_custom_call.1} parent=1 // pred_region
      %93 = dma.done [#allocation9], 1536
    $region41: #{tpu_custom_call.1} parent=1 // pred_fallthru
      _
    // Predicated region
    $region42: #{tpu_custom_call.1} parent=1 // pred_check
      _
    $region43: #{tpu_custom_call.1} parent=1 // pred_check_branch
      %95 = sbr.rel (0) target = $region45
    $region44: #{tpu_custom_call.1} parent=1 // pred_region
      %96 = dma.done [#allocation9], 512
    $region45: #{tpu_custom_call.1} parent=1 // pred_fallthru
      _
    // Predicated region
    $region46: #{tpu_custom_call.1} parent=1 // pred_check
      _
    $region47: #{tpu_custom_call.1} parent=1 // pred_check_branch
      %98 = sbr.rel (0) target = $region49
    $region48: #{tpu_custom_call.1} parent=1 // pred_region
      %99 = dma.done [#allocation12], 256
    $region49: #{tpu_custom_call.1} parent=1 // pred_fallthru
      _
    %s101 = smul.u32 0, 8
    %v102 = vlaneseq
    %v103 = vshrl.u32 %v102, 7
    %v104 = vstv %s101
    %v105 = vadd.s32 %v103, %v104
    %vm106 = vcmp.lt.s32.totalorder %v105, 2
    %v107 = vsel %vm106, 1, 0
    %v108 = vcvt.s32.f32 %v107
    %s109 = ssub.s32 2, %s101
    %p110 = scmp.lt.s32.totalorder %s109, 8
    %s111 = scalar_select %p110, %s109, 8
    %p112 = scmp.gt.s32.totalorder %s111, 1
    %s113 = scalar_select %p112, %s111, 1
    %s114 = scvt.s32.f32 %s113
    %v115 = vld [vmem:[#allocation2] sm:$0xf]
    %v116 = vld [vmem:[#allocation5] sm:$0xff]
    %v118 = vunpack.c.l.b16 %v116
    %v119 = vunpack.c.h.b16 %v116
    %v120 = vpack.c.b16 %v118, %v118
    %v121 = vpack.c.b16 %v119, %v119
    %vm122 = vcmask 64512
    %v124 = vsel %vm122, %v115, 0
    %vm126 = vcmask 1043456
    %v128 = vsel %vm126, %v120, 0
    %v131 = vsel %vm126, %v121, 0
    %133 = vmatprep.subr.bf16.mxu0 %v131
    %134 = vmatpush1.bf16.msra.mxu0 %v128
    %135 = vmatprep.subr.bf16.mxu0 0
    %136 = vmatpush1.bf16.msra.mxu0 0
    %137 = vmatprep.subr.bf16.mxu0 0
    %138 = vmatpush1.bf16.msra.mxu0 0
    %139 = vmatprep.subr.bf16.mxu0 0
    %140 = vmatpush1.bf16.msra.mxu0 0
    %141 = vmatprep.subr.bf16.mxu0 0
    %142 = vmatpush1.bf16.msra.mxu0 0
    %143 = vmatprep.subr.bf16.mxu0 0
    %144 = vmatpush1.bf16.msra.mxu0 0
    %145 = vmatprep.subr.bf16.mxu0 0
    %146 = vmatpush1.bf16.msra.mxu0 0
    %147 = vmatprep.subr.bf16.mxu0 0
    %148 = vmatpush1.bf16.msra.mxu0 0
    %149 = vmatprep.subr.bf16.mxu0 0
    %150 = vmatpush1.bf16.msra.mxu0 0
    %151 = vmatprep.subr.bf16.mxu0 0
    %152 = vmatpush1.bf16.msra.mxu0 0
    %153 = vmatprep.subr.bf16.mxu0 0
    %154 = vmatpush1.bf16.msra.mxu0 0
    %155 = vmatprep.subr.bf16.mxu0 0
    %156 = vmatpush1.bf16.msra.mxu0 0
    %157 = vmatprep.subr.bf16.mxu0 0
    %158 = vmatpush1.bf16.msra.mxu0 0
    %159 = vmatprep.subr.bf16.mxu0 0
    %160 = vmatpush1.bf16.msra.mxu0 0
    %161 = vmatprep.subr.bf16.mxu0 0
    %162 = vmatpush1.bf16.msra.mxu0 0
    %163 = vmatprep.subr.bf16.mxu0 0
    %164 = vmatpush1.bf16.msra.mxu0 0
    %165 = vmatprep.mubr.bf16.mxu0 0
    %166 = vmatmul.mubr.bf16.gmra.mrb[0].mxu0 %v124
    %v167 = vpop.f32.mrb[0].mxu0
    %v168 = vadd.f32 0.0, %v167
    %v169 = vpop.f32.mrb[0].mxu0
    %v170 = vadd.f32 0.0, %v169
    %v171 = vpop.f32.mrb[0].mxu0
    %v172 = vpop.f32.mrb[0].mxu0
    %173 = vdwg.mxu0
    %s174 = smul.f32 %s114, 6.0
    %v175 = vstv %s174
    %v176 = vrcp.pop %v175
    %s177 = vtos %v176
    %v178 = vld [vmem:[#allocation11] ss:$8 sm:$0x3]
    %s179 = scalar_lea.vmem [#allocation11], 1
    %v180 = vld [vmem:[%s179] ss:$8 sm:$0x3]
    %v181 = vrot.slane %v168, 4
    %v182 = vadd.f32 %v168, %v181
    %v183 = vrot.slane %v182, 2
    %v184 = vadd.f32 %v182, %v183
    %v185 = vrot.slane %v184, 1
    %v186 = vadd.f32 %v184, %v185
    %vm187 = vcmask 523264
    %v188 = vsel %vm187, %v170, 0.0
    %v189 = vrot.slane %v188, 4
    %v190 = vadd.f32 %v188, %v189
    %v191 = vrot.slane %v190, 2
    %v192 = vadd.f32 %v190, %v191
    %v193 = vrot.slane %v192, 1
    %v194 = vadd.f32 %v192, %v193
    %v195 = vmul.f32 %v168, %v168
    %v196 = vmul.f32 %v170, %v170
    %v197 = vrot.slane %v195, 4
    %v198 = vadd.f32 %v195, %v197
    %v199 = vrot.slane %v198, 2
    %v200 = vadd.f32 %v198, %v199
    %v201 = vrot.slane %v200, 1
    %v202 = vadd.f32 %v200, %v201
    %v203 = vsel %vm187, %v196, 0.0
    %v204 = vrot.slane %v203, 4
    %v205 = vadd.f32 %v203, %v204
    %v206 = vrot.slane %v205, 2
    %v207 = vadd.f32 %v205, %v206
    %v208 = vrot.slane %v207, 1
    %v209 = vadd.f32 %v207, %v208
    %211 = vrot.lane.b32.xlu0 %v186, 96
    %v212 = vpop.permute.xlu0 %211
    %v214 = vadd.f32 %v186, %v212
    %215 = vrot.lane.b32.xlu0 %v186, 64
    %v216 = vpop.permute.xlu0 %215
    %v218 = vadd.f32 %v214, %v216
    %219 = vrot.lane.b32.xlu0 %v186, 32
    %v220 = vpop.permute.xlu0 %219
    %v222 = vadd.f32 %v218, %v220
    %v223 = vadd.f32 %v222, %v194
    %225 = vrot.lane.b32.xlu0 %v194, 96
    %v226 = vpop.permute.xlu0 %225
    %v228 = vadd.f32 %v223, %v226
    %230 = vrot.lane.b32.xlu0 %v228, 32
    %v231 = vpop.permute.xlu0 %230
    %233 = vrot.lane.b32.xlu0 %v228, 64
    %v234 = vpop.permute.xlu0 %233
    %236 = vrot.lane.b32.xlu0 %v228, 96
    %v237 = vpop.permute.xlu0 %236
    %vm239 = vcmask 261120
    %v240 = vsel %vm239, %v228, %v231
    %v241 = vsel %vm187, %v240, %v234
    %vm242 = vcmask 785408
    %v243 = vsel %vm242, %v241, %v237
    %245 = vrot.lane.b32.xlu0 %v202, 96
    %v246 = vpop.permute.xlu0 %245
    %v248 = vadd.f32 %v202, %v246
    %249 = vrot.lane.b32.xlu0 %v202, 64
    %v250 = vpop.permute.xlu0 %249
    %v252 = vadd.f32 %v248, %v250
    %253 = vrot.lane.b32.xlu0 %v202, 32
    %v254 = vpop.permute.xlu0 %253
    %v256 = vadd.f32 %v252, %v254
    %v257 = vadd.f32 %v256, %v209
    %259 = vrot.lane.b32.xlu0 %v209, 96
    %v260 = vpop.permute.xlu0 %259
    %v262 = vadd.f32 %v257, %v260
    %264 = vrot.lane.b32.xlu0 %v262, 32
    %v265 = vpop.permute.xlu0 %264
    %267 = vrot.lane.b32.xlu0 %v262, 64
    %v268 = vpop.permute.xlu0 %267
    %270 = vrot.lane.b32.xlu0 %v262, 96
    %v271 = vpop.permute.xlu0 %270
    %v273 = vsel %vm239, %v262, %v265
    %v274 = vsel %vm187, %v273, %v268
    %v275 = vsel %vm242, %v274, %v271
    %v276 = vstv %s177
    %v277 = vmul.f32 %v243, %v276
    %v278 = vmul.f32 %v240, %v276
    %v279 = vmul.f32 %v275, %v276
    %v280 = vmul.f32 %v273, %v276
    %v281 = vmul.f32 %v277, %v277
    %v282 = vmul.f32 %v278, %v278
    %v283 = vsub.f32 %v279, %v281
    %v284 = vsub.f32 %v280, %v282
    %v285 = vmax.f32 %v283, 0.0
    %v286 = vmax.f32 %v284, 0.0
    %v287 = vadd.f32 %v285, 1e-05
    %v288 = vadd.f32 %v286, 1e-05
    %v289 = vrsqrt.pop %v287
    %v290 = vrsqrt.pop %v288
    %v293 = vcombine.low %v289, %v290
    %v295 = vunpack.c.l.s4 1966171168
    %v296 = vunpack.c.0.s8 %v295
    %v297 = vlaneseq
    %v298 = vshrl.u32 %v297, 7
    %v299 = vsub.s32 %v296, %v298
    %v300 = vrot.slane %v293, %v299
    %v302 = vunpack.c.l.s4 1966171168
    %v303 = vunpack.c.0.s8 %v302
    %v304 = vlaneseq
    %v305 = vshrl.u32 %v304, 7
    %v306 = vsub.s32 %v303, %v305
    %v307 = vrot.slane %v300, %v306
    %v309 = vmul.f32 %v178, %v307
    %v311 = vlaneseq
    %v312 = vshrl.u32 %v311, 7
    %v313 = vsub.s32 0, %v312
    %v314 = vrot.slane %v309, %v313
    %v315 = vlaneseq
    %v316 = vshrl.u32 %v315, 7
    %v317 = vsub.s32 1, %v316
    %v318 = vrot.slane %v309, %v317
    %v321 = vmul.f32 %v277, %v314
    %v322 = vmul.f32 %v278, %v318
    %v325 = vcombine.low %v321, %v322
    %v327 = vunpack.c.l.s4 1966171168
    %v328 = vunpack.c.0.s8 %v327
    %v329 = vlaneseq
    %v330 = vshrl.u32 %v329, 7
    %v331 = vsub.s32 %v328, %v330
    %v332 = vrot.slane %v325, %v331
    %v334 = vunpack.c.l.s4 1966171168
    %v335 = vunpack.c.0.s8 %v334
    %v336 = vlaneseq
    %v337 = vshrl.u32 %v336, 7
    %v338 = vsub.s32 %v335, %v337
    %v339 = vrot.slane %v332, %v338
    %v341 = vsub.f32 %v180, %v339
    %v342 = vmul.f32 %v168, %v314
    %v343 = vmul.f32 %v170, %v318
    %v345 = vlaneseq
    %v346 = vshrl.u32 %v345, 7
    %v347 = vsub.s32 0, %v346
    %v348 = vrot.slane %v341, %v347
    %v349 = vlaneseq
    %v350 = vshrl.u32 %v349, 7
    %v351 = vsub.s32 1, %v350
    %v352 = vrot.slane %v341, %v351
    %v355 = vadd.f32 %v342, %v348
    %v356 = vadd.f32 %v343, %v352
    %v357 = vmax.f32 %v355, 0.0
    %v358 = vmax.f32 %v356, 0.0
    %361 = vrot.lane.b32.xlu0 %v357, 96
    %v362 = vpop.permute.xlu0 %361
    %363 = vrot.lane.b32.xlu0 %v358, 96
    %v364 = vpop.permute.xlu0 %363
    %v365 = vsel %vm242, %v362, %v364
    %v368 = vmax.f32 %v357, %v365
    %v369 = vmax.f32 %v358, %v364
    %v370 = vmul.f32 %v368, %v108
    %v371 = vmul.f32 %v369, %v108
    %v372 = vpack.c.bf16 %v370, %v370
    %v373 = vpack.c.bf16 %v371, %v371
    %v374 = vld [vmem:[#allocation7] sm:$0xff]
    %v375 = vld [vmem:[#allocation7 + $0x8] sm:$0xff]
    %v376 = vld [vmem:[#allocation7 + $0x10] sm:$0xff]
    %v377 = vld [vmem:[#allocation7 + $0x18] sm:$0xff]
    %v378 = vld [vmem:[#allocation7 + $0x20] sm:$0xff]
    %v379 = vld [vmem:[#allocation7 + $0x28] sm:$0xff]
    %v380 = vld [vmem:[#allocation7 + $0x30] sm:$0xff]
    %v381 = vld [vmem:[#allocation7 + $0x38] sm:$0xff]
    %v382 = vld [vmem:[#allocation7 + $0x40] sm:$0xff]
    %v383 = vld [vmem:[#allocation7 + $0x48] sm:$0xff]
    %v384 = vld [vmem:[#allocation7 + $0x50] sm:$0xff]
    %v385 = vld [vmem:[#allocation7 + $0x58] sm:$0xff]
    %v386 = vld [vmem:[#allocation7 + $0x60] sm:$0xff]
    %v387 = vld [vmem:[#allocation7 + $0x68] sm:$0xff]
    %v388 = vld [vmem:[#allocation7 + $0x70] sm:$0xff]
    %v389 = vld [vmem:[#allocation7 + $0x78] sm:$0xff]
    %v390 = vld [vmem:[#allocation7 + $0x80] sm:$0xff]
    %v391 = vld [vmem:[#allocation7 + $0x88] sm:$0xff]
    %v392 = vld [vmem:[#allocation7 + $0x90] sm:$0xff]
    %v393 = vld [vmem:[#allocation7 + $0x98] sm:$0xff]
    %v414 = vunpack.c.l.b16 %v374
    %v415 = vunpack.c.h.b16 %v374
    %v416 = vunpack.c.l.b16 %v375
    %v417 = vunpack.c.h.b16 %v375
    %v418 = vunpack.c.l.b16 %v376
    %v419 = vunpack.c.h.b16 %v376
    %v420 = vunpack.c.l.b16 %v377
    %v421 = vunpack.c.h.b16 %v377
    %v422 = vunpack.c.l.b16 %v378
    %v423 = vunpack.c.h.b16 %v378
    %v424 = vunpack.c.l.b16 %v379
    %v425 = vunpack.c.h.b16 %v379
    %v426 = vunpack.c.l.b16 %v380
    %v427 = vunpack.c.h.b16 %v380
    %v428 = vunpack.c.l.b16 %v381
    %v429 = vunpack.c.h.b16 %v381
    %v430 = vunpack.c.l.b16 %v382
    %v431 = vunpack.c.h.b16 %v382
    %v432 = vunpack.c.l.b16 %v383
    %v433 = vunpack.c.h.b16 %v383
    %v434 = vunpack.c.l.b16 %v384
    %v435 = vunpack.c.h.b16 %v384
    %v436 = vunpack.c.l.b16 %v385
    %v437 = vunpack.c.h.b16 %v385
    %v438 = vunpack.c.l.b16 %v386
    %v439 = vunpack.c.h.b16 %v386
    %v440 = vunpack.c.l.b16 %v387
    %v441 = vunpack.c.h.b16 %v387
    %v442 = vunpack.c.l.b16 %v388
    %v443 = vunpack.c.h.b16 %v388
    %v444 = vunpack.c.l.b16 %v389
    %v445 = vunpack.c.h.b16 %v389
    %v446 = vunpack.c.l.b16 %v390
    %v447 = vunpack.c.h.b16 %v390
    %v448 = vunpack.c.l.b16 %v391
    %v449 = vunpack.c.h.b16 %v391
    %v450 = vunpack.c.l.b16 %v392
    %v451 = vunpack.c.h.b16 %v392
    %v452 = vunpack.c.l.b16 %v393
    %v453 = vunpack.c.h.b16 %v393
    %v454 = vpack.c.b16 %v416, %v414
    %v455 = vpack.c.b16 %v417, %v415
    %v456 = vpack.c.b16 %v420, %v418
    %v457 = vpack.c.b16 %v421, %v419
    %v458 = vpack.c.b16 %v424, %v422
    %v459 = vpack.c.b16 %v425, %v423
    %v460 = vpack.c.b16 %v428, %v426
    %v461 = vpack.c.b16 %v429, %v427
    %v462 = vpack.c.b16 %v432, %v430
    %v463 = vpack.c.b16 %v433, %v431
    %v464 = vpack.c.b16 %v436, %v434
    %v465 = vpack.c.b16 %v437, %v435
    %v466 = vpack.c.b16 %v440, %v438
    %v467 = vpack.c.b16 %v441, %v439
    %v468 = vpack.c.b16 %v444, %v442
    %v469 = vpack.c.b16 %v445, %v443
    %v470 = vpack.c.b16 %v448, %v446
    %v471 = vpack.c.b16 %v449, %v447
    %v472 = vpack.c.b16 %v452, %v450
    %v473 = vpack.c.b16 %v453, %v451
    %v495 = vsel %vm239, %v373, 0
    %497 = vmatprep.subr.bf16.mxu0 %v455
    %498 = vmatpush1.bf16.msra.mxu0 %v454
    %499 = vmatprep.subr.bf16.mxu0 %v457
    %500 = vmatpush1.bf16.msra.mxu0 %v456
    %501 = vmatprep.subr.bf16.mxu0 %v459
    %502 = vmatpush1.bf16.msra.mxu0 %v458
    %503 = vmatprep.subr.bf16.mxu0 %v461
    %504 = vmatpush1.bf16.msra.mxu0 %v460
    %505 = vmatprep.subr.bf16.mxu0 %v463
    %506 = vmatpush1.bf16.msra.mxu0 %v462
    %507 = vmatprep.subr.bf16.mxu0 %v465
    %508 = vmatpush1.bf16.msra.mxu0 %v464
    %509 = vmatprep.subr.bf16.mxu0 %v467
    %510 = vmatpush1.bf16.msra.mxu0 %v466
    %511 = vmatprep.subr.bf16.mxu0 %v469
    %512 = vmatpush1.bf16.msra.mxu0 %v468
    %513 = vmatprep.subr.bf16.mxu0 %v471
    %514 = vmatpush1.bf16.msra.mxu0 %v470
    %515 = vmatprep.subr.bf16.mxu0 %v473
    %516 = vmatpush1.bf16.msra.mxu0 %v472
    %517 = vmatprep.subr.bf16.mxu0 0
    %518 = vmatpush1.bf16.msra.mxu0 0
    %519 = vmatprep.subr.bf16.mxu0 0
    %520 = vmatpush1.bf16.msra.mxu0 0
    %521 = vmatprep.subr.bf16.mxu0 0
    %522 = vmatpush1.bf16.msra.mxu0 0
    %523 = vmatprep.subr.bf16.mxu0 0
    %524 = vmatpush1.bf16.msra.mxu0 0
    %525 = vmatprep.subr.bf16.mxu0 0
    %526 = vmatpush1.bf16.msra.mxu0 0
    %527 = vmatprep.subr.bf16.mxu0 0
    %528 = vmatpush1.bf16.msra.mxu0 0
    %529 = vmatprep.mubr.bf16.mxu0 %v495
    %530 = vmatmul.mubr.bf16.gmra.mrb[0].mxu0 %v372
    %v531 = vpop.f32.mrb[0].mxu0
    %v532 = vadd.f32 0.0, %v531
    %v533 = vpop.f32.mrb[0].mxu0
    %v534 = vadd.f32 0.0, %v533
    %v535 = vpop.f32.mrb[0].mxu0
    %v536 = vpop.f32.mrb[0].mxu0
    %537 = vdwg.mxu0
    %s538 = smul.f32 %s114, 3.0
    %v539 = vstv %s538
    %v540 = vrcp.pop %v539
    %s541 = vtos %v540
    %s542 = scalar_lea.vmem [#allocation11], 2
    %v543 = vld [vmem:[%s542] ss:$8 sm:$0x3]
    %s544 = scalar_lea.vmem [#allocation11], 3
    %v545 = vld [vmem:[%s544] ss:$8 sm:$0x3]
    %v546 = vrot.slane %v532, 4
    %v547 = vadd.f32 %v532, %v546
    %v548 = vrot.slane %v547, 2
    %v549 = vadd.f32 %v547, %v548
    %v550 = vrot.slane %v549, 1
    %v551 = vadd.f32 %v549, %v550
    %v552 = vsel %vm187, %v534, 0.0
    %v553 = vrot.slane %v552, 4
    %v554 = vadd.f32 %v552, %v553
    %v555 = vrot.slane %v554, 2
    %v556 = vadd.f32 %v554, %v555
    %v557 = vrot.slane %v556, 1
    %v558 = vadd.f32 %v556, %v557
    %v559 = vmul.f32 %v532, %v532
    %v560 = vmul.f32 %v534, %v534
    %v561 = vrot.slane %v559, 4
    %v562 = vadd.f32 %v559, %v561
    %v563 = vrot.slane %v562, 2
    %v564 = vadd.f32 %v562, %v563
    %v565 = vrot.slane %v564, 1
    %v566 = vadd.f32 %v564, %v565
    %v567 = vsel %vm187, %v560, 0.0
    %v568 = vrot.slane %v567, 4
    %v569 = vadd.f32 %v567, %v568
    %v570 = vrot.slane %v569, 2
    %v571 = vadd.f32 %v569, %v570
    %v572 = vrot.slane %v571, 1
    %v573 = vadd.f32 %v571, %v572
    %575 = vrot.lane.b32.xlu0 %v551, 64
    %v576 = vpop.permute.xlu0 %575
    %v578 = vadd.f32 %v551, %v576
    %v579 = vadd.f32 %v578, %v558
    %581 = vrot.lane.b32.xlu0 %v579, 64
    %v582 = vpop.permute.xlu0 %581
    %v584 = vsel %vm187, %v579, %v582
    %586 = vrot.lane.b32.xlu0 %v566, 64
    %v587 = vpop.permute.xlu0 %586
    %v589 = vadd.f32 %v566, %v587
    %v590 = vadd.f32 %v589, %v573
    %592 = vrot.lane.b32.xlu0 %v590, 64
    %v593 = vpop.permute.xlu0 %592
    %v595 = vsel %vm187, %v590, %v593
    %v596 = vstv %s541
    %v597 = vmul.f32 %v584, %v596
    %v598 = vmul.f32 %v579, %v596
    %v599 = vmul.f32 %v595, %v596
    %v600 = vmul.f32 %v590, %v596
    %v601 = vmul.f32 %v597, %v597
    %v602 = vmul.f32 %v598, %v598
    %v603 = vsub.f32 %v599, %v601
    %v604 = vsub.f32 %v600, %v602
    %v605 = vmax.f32 %v603, 0.0
    %v606 = vmax.f32 %v604, 0.0
    %v607 = vadd.f32 %v605, 1e-05
    %v608 = vadd.f32 %v606, 1e-05
    %v609 = vrsqrt.pop %v607
    %v610 = vrsqrt.pop %v608
    %v613 = vcombine.low %v609, %v610
    %v615 = vunpack.c.l.s4 1966171168
    %v616 = vunpack.c.0.s8 %v615
    %v617 = vlaneseq
    %v618 = vshrl.u32 %v617, 7
    %v619 = vsub.s32 %v616, %v618
    %v620 = vrot.slane %v613, %v619
    %v622 = vunpack.c.l.s4 1966171168
    %v623 = vunpack.c.0.s8 %v622
    %v624 = vlaneseq
    %v625 = vshrl.u32 %v624, 7
    %v626 = vsub.s32 %v623, %v625
    %v627 = vrot.slane %v620, %v626
    %v629 = vmul.f32 %v543, %v627
    %v631 = vlaneseq
    %v632 = vshrl.u32 %v631, 7
    %v633 = vsub.s32 0, %v632
    %v634 = vrot.slane %v629, %v633
    %v635 = vlaneseq
    %v636 = vshrl.u32 %v635, 7
    %v637 = vsub.s32 1, %v636
    %v638 = vrot.slane %v629, %v637
    %v641 = vmul.f32 %v597, %v634
    %v642 = vmul.f32 %v598, %v638
    %v645 = vcombine.low %v641, %v642
    %v647 = vunpack.c.l.s4 1966171168
    %v648 = vunpack.c.0.s8 %v647
    %v649 = vlaneseq
    %v650 = vshrl.u32 %v649, 7
    %v651 = vsub.s32 %v648, %v650
    %v652 = vrot.slane %v645, %v651
    %v654 = vunpack.c.l.s4 1966171168
    %v655 = vunpack.c.0.s8 %v654
    %v656 = vlaneseq
    %v657 = vshrl.u32 %v656, 7
    %v658 = vsub.s32 %v655, %v657
    %v659 = vrot.slane %v652, %v658
    %v661 = vsub.f32 %v545, %v659
    %v662 = vmul.f32 %v532, %v634
    %v663 = vmul.f32 %v534, %v638
    %v665 = vlaneseq
    %v666 = vshrl.u32 %v665, 7
    %v667 = vsub.s32 0, %v666
    %v668 = vrot.slane %v661, %v667
    %v669 = vlaneseq
    %v670 = vshrl.u32 %v669, 7
    %v671 = vsub.s32 1, %v670
    %v672 = vrot.slane %v661, %v671
    %v675 = vadd.f32 %v662, %v668
    %v676 = vadd.f32 %v663, %v672
    %v677 = vmax.f32 %v675, 0.0
    %v678 = vmax.f32 %v676, 0.0
    %v679 = vpack.c.bf16 %v677, %v677
    %v680 = vpack.c.bf16 %v678, %v678
    %v681 = vld [vmem:[#allocation8] sm:$0xf]
    %v682 = vld [vmem:[#allocation8 + $0x4] sm:$0xf]
    %v683 = vld [vmem:[#allocation8 + $0x8] sm:$0xf]
    %v684 = vld [vmem:[#allocation8 + $0xc] sm:$0xf]
    %v685 = vld [vmem:[#allocation8 + $0x10] sm:$0xf]
    %v686 = vld [vmem:[#allocation8 + $0x14] sm:$0xf]
    %v687 = vld [vmem:[#allocation8 + $0x18] sm:$0xf]
    %v688 = vld [vmem:[#allocation8 + $0x1c] sm:$0xf]
    %v689 = vld [vmem:[#allocation8 + $0x20] sm:$0xf]
    %v690 = vld [vmem:[#allocation8 + $0x24] sm:$0xf]
    %v691 = vld [vmem:[#allocation8 + $0x28] sm:$0xf]
    %v692 = vld [vmem:[#allocation8 + $0x2c] sm:$0xf]
    %v693 = vld [vmem:[#allocation8 + $0x30] sm:$0xf]
    %v694 = vld [vmem:[#allocation8 + $0x34] sm:$0xf]
    %v695 = vld [vmem:[#allocation8 + $0x38] sm:$0xf]
    %v696 = vld [vmem:[#allocation8 + $0x3c] sm:$0xf]
    %v697 = vld [vmem:[#allocation8 + $0x40] sm:$0xf]
    %v698 = vld [vmem:[#allocation8 + $0x44] sm:$0xf]
    %v699 = vld [vmem:[#allocation8 + $0x48] sm:$0xf]
    %v700 = vld [vmem:[#allocation8 + $0x4c] sm:$0xf]
    %v701 = vld [vmem:[#allocation8 + $0x50] sm:$0xf]
    %v702 = vld [vmem:[#allocation8 + $0x54] sm:$0xf]
    %v703 = vld [vmem:[#allocation8 + $0x58] sm:$0xf]
    %v704 = vld [vmem:[#allocation8 + $0x5c] sm:$0xf]
    %v705 = vld [vmem:[#allocation11 + $0x4] ss:$0 sm:$0xff]
    %v730 = vunpack.c.l.b16 %v681
    %v731 = vunpack.c.l.b16 %v682
    %v732 = vunpack.c.l.b16 %v683
    %v733 = vunpack.c.l.b16 %v684
    %v734 = vunpack.c.l.b16 %v685
    %v735 = vunpack.c.l.b16 %v686
    %v736 = vunpack.c.l.b16 %v687
    %v737 = vunpack.c.l.b16 %v688
    %v738 = vunpack.c.l.b16 %v689
    %v739 = vunpack.c.l.b16 %v690
    %v740 = vunpack.c.l.b16 %v691
    %v741 = vunpack.c.l.b16 %v692
    %v742 = vunpack.c.l.b16 %v693
    %v743 = vunpack.c.l.b16 %v694
    %v744 = vunpack.c.l.b16 %v695
    %v745 = vunpack.c.l.b16 %v696
    %v746 = vunpack.c.l.b16 %v697
    %v747 = vunpack.c.l.b16 %v698
    %v748 = vunpack.c.l.b16 %v699
    %v749 = vunpack.c.l.b16 %v700
    %v750 = vunpack.c.l.b16 %v701
    %v751 = vunpack.c.l.b16 %v702
    %v752 = vunpack.c.l.b16 %v703
    %v753 = vunpack.c.l.b16 %v704
    %v754 = vpack.c.b16 %v731, %v730
    %v755 = vpack.c.b16 %v733, %v732
    %v756 = vpack.c.b16 %v735, %v734
    %v757 = vpack.c.b16 %v737, %v736
    %v758 = vpack.c.b16 %v739, %v738
    %v759 = vpack.c.b16 %v741, %v740
    %v760 = vpack.c.b16 %v743, %v742
    %v761 = vpack.c.b16 %v745, %v744
    %v762 = vpack.c.b16 %v747, %v746
    %v763 = vpack.c.b16 %v749, %v748
    %v764 = vpack.c.b16 %v751, %v750
    %v765 = vpack.c.b16 %v753, %v752
    %v779 = vsel %vm187, %v680, 0
    %781 = vmatprep.subr.bf16.mxu0 0
    %782 = vmatpush1.bf16.msra.mxu0 %v754
    %783 = vmatprep.subr.bf16.mxu0 0
    %784 = vmatpush1.bf16.msra.mxu0 %v755
    %785 = vmatprep.subr.bf16.mxu0 0
    %786 = vmatpush1.bf16.msra.mxu0 %v756
    %787 = vmatprep.subr.bf16.mxu0 0
    %788 = vmatpush1.bf16.msra.mxu0 %v757
    %789 = vmatprep.subr.bf16.mxu0 0
    %790 = vmatpush1.bf16.msra.mxu0 %v758
    %791 = vmatprep.subr.bf16.mxu0 0
    %792 = vmatpush1.bf16.msra.mxu0 %v759
    %793 = vmatprep.subr.bf16.mxu0 0
    %794 = vmatpush1.bf16.msra.mxu0 %v760
    %795 = vmatprep.subr.bf16.mxu0 0
    %796 = vmatpush1.bf16.msra.mxu0 %v761
    %797 = vmatprep.subr.bf16.mxu0 0
    %798 = vmatpush1.bf16.msra.mxu0 %v762
    %799 = vmatprep.subr.bf16.mxu0 0
    %800 = vmatpush1.bf16.msra.mxu0 %v763
    %801 = vmatprep.subr.bf16.mxu0 0
    %802 = vmatpush1.bf16.msra.mxu0 %v764
    %803 = vmatprep.subr.bf16.mxu0 0
    %804 = vmatpush1.bf16.msra.mxu0 %v765
    %805 = vmatprep.subr.bf16.mxu0 0
    %806 = vmatpush1.bf16.msra.mxu0 0
    %807 = vmatprep.subr.bf16.mxu0 0
    %808 = vmatpush1.bf16.msra.mxu0 0
    %809 = vmatprep.subr.bf16.mxu0 0
    %810 = vmatpush1.bf16.msra.mxu0 0
    %811 = vmatprep.subr.bf16.mxu0 0
    %812 = vmatpush1.bf16.msra.mxu0 0
    %813 = vmatprep.mubr.bf16.mxu0 %v779
    %814 = vmatmul.mubr.bf16.gmra.mrb[0].mxu0 %v679
    %v815 = vpop.f32.mrb[0].mxu0
    %v816 = vadd.f32 %v705, %v815
    %v817 = vpop.f32.mrb[0].mxu0
    %v818 = vpop.f32.mrb[0].mxu0
    %v819 = vpop.f32.mrb[0].mxu0
    %820 = vdwg.mxu0
    %v821 = vmax.f32 %v816, 0.0
    %v822 = vpack.c.bf16 %v821, %v821
    %v823 = vld [vmem:[#allocation10] sm:$0xf]
    %v824 = vld [vmem:[#allocation10 + $0x4] sm:$0xf]
    %v825 = vld [vmem:[#allocation10 + $0x8] sm:$0xf]
    %v826 = vld [vmem:[#allocation10 + $0xc] sm:$0xf]
    %v827 = vld [vmem:[#allocation10 + $0x10] sm:$0xf]
    %v828 = vld [vmem:[#allocation10 + $0x14] sm:$0xf]
    %v829 = vld [vmem:[#allocation10 + $0x18] sm:$0xf]
    %v830 = vld [vmem:[#allocation10 + $0x1c] sm:$0xf]
    %v831 = vld [vmem:[#allocation11 + $0x5] ss:$0 sm:$0xff]
    %v840 = vunpack.c.l.b16 %v823
    %v841 = vunpack.c.l.b16 %v824
    %v842 = vunpack.c.l.b16 %v825
    %v843 = vunpack.c.l.b16 %v826
    %v844 = vunpack.c.l.b16 %v827
    %v845 = vunpack.c.l.b16 %v828
    %v846 = vunpack.c.l.b16 %v829
    %v847 = vunpack.c.l.b16 %v830
    %v848 = vpack.c.b16 %v841, %v840
    %v849 = vpack.c.b16 %v843, %v842
    %v850 = vpack.c.b16 %v845, %v844
    %v851 = vpack.c.b16 %v847, %v846
    %v857 = vsel %vm187, %v822, 0
    %859 = vmatprep.subr.bf16.mxu0 0
    %860 = vmatpush1.bf16.msra.mxu0 %v848
    %861 = vmatprep.subr.bf16.mxu0 0
    %862 = vmatpush1.bf16.msra.mxu0 %v849
    %863 = vmatprep.subr.bf16.mxu0 0
    %864 = vmatpush1.bf16.msra.mxu0 %v850
    %865 = vmatprep.subr.bf16.mxu0 0
    %866 = vmatpush1.bf16.msra.mxu0 %v851
    %867 = vmatprep.subr.bf16.mxu0 0
    %868 = vmatpush1.bf16.msra.mxu0 0
    %869 = vmatprep.subr.bf16.mxu0 0
    %870 = vmatpush1.bf16.msra.mxu0 0
    %871 = vmatprep.subr.bf16.mxu0 0
    %872 = vmatpush1.bf16.msra.mxu0 0
    %873 = vmatprep.subr.bf16.mxu0 0
    %874 = vmatpush1.bf16.msra.mxu0 0
    %875 = vmatprep.subr.bf16.mxu0 0
    %876 = vmatpush1.bf16.msra.mxu0 0
    %877 = vmatprep.subr.bf16.mxu0 0
    %878 = vmatpush1.bf16.msra.mxu0 0
    %879 = vmatprep.subr.bf16.mxu0 0
    %880 = vmatpush1.bf16.msra.mxu0 0
    %881 = vmatprep.subr.bf16.mxu0 0
    %882 = vmatpush1.bf16.msra.mxu0 0
    %883 = vmatprep.subr.bf16.mxu0 0
    %884 = vmatpush1.bf16.msra.mxu0 0
    %885 = vmatprep.subr.bf16.mxu0 0
    %886 = vmatpush1.bf16.msra.mxu0 0
    %887 = vmatprep.subr.bf16.mxu0 0
    %888 = vmatpush1.bf16.msra.mxu0 0
    %889 = vmatprep.subr.bf16.mxu0 0
    %890 = vmatpush1.bf16.msra.mxu0 0
    %891 = vmatprep.mubr.bf16.mxu0 0
    %892 = vmatmul.mubr.bf16.gmra.mrb[0].mxu0 %v857
    %v893 = vpop.f32.mrb[0].mxu0
    %v894 = vadd.f32 %v831, %v893
    %v895 = vpop.f32.mrb[0].mxu0
    %v896 = vpop.f32.mrb[0].mxu0
    %v897 = vpop.f32.mrb[0].mxu0
    %898 = vdwg.mxu0
    %v899 = vmax.f32 %v894, 0.0
    %900 = vst [vmem:[#allocation13] sm:$0xff] %v899
    // Predicated region
    $region50: #{tpu_custom_call.1} parent=1 // pred_check
      _
    $region51: #{tpu_custom_call.1} parent=1 // pred_check_branch
      %902 = sbr.rel (0) target = $region53
    $region52: #{tpu_custom_call.1} parent=1 // pred_region
      %s904 = ssub.s32 128, 128
      %905 = vsyncadd [#allocation4], %s904
      %s907 = sshll.u32 [#allocation13], 4
      %s908 = int_to_ptr.vmem [resolvable:$true] %s907
      %910 = dma.vmem_to_hbm [thread:$0]  %s908, 128, %s6, [#allocation4]
    $region53: #{tpu_custom_call.1} parent=1 // pred_fallthru
      _
    // Predicated region
    $region54: #{tpu_custom_call.1} parent=1 // pred_check
      _
    $region55: #{tpu_custom_call.1} parent=1 // pred_check_branch
      %912 = sbr.rel (0) target = $region57
    $region56: #{tpu_custom_call.1} parent=1 // pred_region
      %913 = dma.done [#allocation4], 128
    $region57: #{tpu_custom_call.1} parent=1 // pred_fallthru
      _
    %914 = vsyncpa [#allocation3], 1
    %915 = vsyncpa [#allocation6], 1
    %916 = vsyncpa [#allocation9], 1
    %917 = vsyncpa [#allocation12], 1
    %918 = vsyncpa [#allocation4], 1

</llo_original>
